<compile_context>
chip_gen: v6e
topology: v6e:2x2x1
jax: 0.10.0
libtpu: 0.0.40
codegen_flags: <defaults>
</compile_context>

<pallas_src>
import functools
import math

import jax
import jax.numpy as jnp
from jax.experimental import pallas as pl
from jax.experimental.pallas import tpu as pltpu


def _round_up(x, m):
    return (x + m - 1) // m * m


def _timestep_embedder_kernel(t_ref, w1_ref, b1_ref, w2_ref, b2_ref, o_ref, *,
                              half, max_period):
    # (tm, 1) timestep column for this batch tile; activation math in f32.
    t = t_ref[...].astype(jnp.float32)

    # Frequencies computed in-kernel (no extra HBM input): (1, half) along lanes.
    idx = jax.lax.broadcasted_iota(jnp.int32, (1, half), 1).astype(jnp.float32)
    freqs = jnp.exp(-math.log(max_period) * idx / half)          # (1, half)

    args = t * freqs                                             # (tm, half)
    # half is a multiple of 128, so this concat is layout-only (two lane groups)
    # and the first Linear is a single K=2*half MXU push (fills v6e/v7x depth).
    emb = jnp.concatenate([jnp.cos(args), jnp.sin(args)], axis=-1)   # (tm, 2*half)

    w_dt = w1_ref.dtype
    h = (jnp.dot(emb.astype(w_dt), w1_ref[...],
                 preferred_element_type=jnp.float32)
         + b1_ref[...].astype(jnp.float32))

    # SiLU(x) = x * sigmoid(x); exact sigmoid as a single tanh EUP op.
    h = h * (0.5 * jnp.tanh(0.5 * h) + 0.5)

    # Second Linear (hidden_pad x hidden_pad, lane-dense output).
    out = (jnp.dot(h.astype(w2_ref.dtype), w2_ref[...],
                   preferred_element_type=jnp.float32)
           + b2_ref[...].astype(jnp.float32))
    o_ref[...] = out.astype(o_ref.dtype)


def gen2d_timestep_embedder(t, w1, b1, w2, b2, *, frequency_embedding_size=256,
                            max_period=10000, block_b=2048):
    """t: (B,) timesteps. w1: (freq, hidden), w2: (hidden, hidden) (PyTorch
    weights transposed so y = x @ W + b). Returns (B, hidden) in w2's dtype."""
    # TODO(synk): odd frequency_embedding_size (zero-pad column) not implemented.
    assert frequency_embedding_size % 2 == 0, "odd freq-embedding size unsupported"
    B = t.shape[0]
    half = frequency_embedding_size // 2
    hidden = w1.shape[1]
    out_dtype = w2.dtype

    # --- lane-dense hidden padding (zero-pad -> exact), done once offline. ---
    hidden_pad = _round_up(hidden, 128)
    if hidden_pad != hidden:
        hp = hidden_pad - hidden
        w1 = jnp.pad(w1, ((0, 0), (0, hp)))
        b1 = jnp.pad(b1, ((0, hp),))
        w2 = jnp.pad(w2, ((0, hp), (0, hp)))
        b2 = jnp.pad(b2, ((0, hp),))

    # --- batch tiling: big tiles amortize ~0.35us/grid-step; >=2 steps when the
    # batch is large so "parallel" can shard across both TCs on v7x. ---
    b_rows = _round_up(B, 8)
    tm = min(block_b, b_rows)
    if b_rows >= 1024 and pl.cdiv(b_rows, tm) < 2:
        tm = _round_up(pl.cdiv(b_rows, 2), 8)
    B_pad = _round_up(b_rows, tm)
    nb = B_pad // tm

    # Cheap layout glue (no dtype casts on weights -> no extra HBM traffic).
    t2 = t.reshape(B, 1)
    if B_pad != B:
        t2 = jnp.pad(t2, ((0, B_pad - B), (0, 0)))
    b1_2 = b1.reshape(1, hidden_pad)
    b2_2 = b2.reshape(1, hidden_pad)

    kernel = functools.partial(_timestep_embedder_kernel,
                               half=half, max_period=max_period)

    itemsize = lambda a: a.size * jnp.dtype(a.dtype).itemsize
    cost = pl.CostEstimate(
        flops=2 * B_pad * (frequency_embedding_size * hidden_pad
                           + hidden_pad * hidden_pad),
        transcendentals=B_pad * (frequency_embedding_size + hidden_pad) + half,
        bytes_accessed=(itemsize(w1) + itemsize(w2) + itemsize(b1) + itemsize(b2)
                        + itemsize(t2)
                        + B_pad * hidden_pad * jnp.dtype(out_dtype).itemsize),
    )

    out = pl.pallas_call(
        kernel,
        out_shape=jax.ShapeDtypeStruct((B_pad, hidden_pad), out_dtype),
        grid=(nb,),
        in_specs=[
            pl.BlockSpec((tm, 1), lambda i: (i, 0)),                            # t tile
            pl.BlockSpec((frequency_embedding_size, hidden_pad), lambda i: (0, 0)),  # w1 resident
            pl.BlockSpec((1, hidden_pad), lambda i: (0, 0)),                    # b1 resident
            pl.BlockSpec((hidden_pad, hidden_pad), lambda i: (0, 0)),           # w2 resident
            pl.BlockSpec((1, hidden_pad), lambda i: (0, 0)),                    # b2 resident
        ],
        out_specs=pl.BlockSpec((tm, hidden_pad), lambda i: (i, 0)),
        compiler_params=pltpu.CompilerParams(
            dimension_semantics=("parallel",)),   # shards batch across TCs on v7x
        cost_estimate=cost,
    )(t2, w1, b1_2, w2, b2_2)

    if B_pad != B or hidden_pad != hidden:
        out = out[:B, :hidden]
    return out


def _reference(t, w1, b1, w2, b2, frequency_embedding_size=256, max_period=10000):
    half = frequency_embedding_size // 2
    freqs = jnp.exp(-math.log(max_period) * jnp.arange(half, dtype=jnp.float32) / half)
    args = t[:, None].astype(jnp.float32) * freqs[None]
    emb = jnp.concatenate([jnp.cos(args), jnp.sin(args)], axis=-1).astype(t.dtype)
    h = emb @ w1 + b1
    h = h * jax.nn.sigmoid(h)
    return h @ w2 + b2


if __name__ == "__main__":
    B = 8
    hidden = 32
    freq_size = 256

    key = jax.random.PRNGKey(0)
    k_t, k_w1, k_b1, k_w2, k_b2 = jax.random.split(key, 5)

    # Deterministic synthetic parameters (shapes from nn.Linear in __init__),
    # stored as (in_features, out_features) = PyTorch weight transposed.
    t = jax.random.uniform(k_t, (B,), dtype=jnp.float32) * 1000.0
    w1 = jax.random.normal(k_w1, (freq_size, hidden), dtype=jnp.float32) * 0.02
    b1 = jax.random.normal(k_b1, (hidden,), dtype=jnp.float32) * 0.02
    w2 = jax.random.normal(k_w2, (hidden, hidden), dtype=jnp.float32) * 0.02
    b2 = jax.random.normal(k_b2, (hidden,), dtype=jnp.float32) * 0.02

    out = gen2d_timestep_embedder(
        t, w1, b1, w2, b2, frequency_embedding_size=freq_size
    )
    jax.block_until_ready(out)

    ref = _reference(t, w1, b1, w2, b2, frequency_embedding_size=freq_size)
    assert out.shape == (B, hidden), out.shape
    assert jnp.allclose(out, ref, atol=1e-4, rtol=1e-4), "mismatch vs. reference"

    print("KERNEL_OK")
</pallas_src>

<mosaic_0001>
module attributes {stable_mosaic.version = 11 : i64} {
  func.func @_timestep_embedder_kernel(%arg0: i32, %arg1: memref<8x1xf32, #tpu.memory_space<vmem>>, %arg2: memref<256x128xf32, #tpu.memory_space<vmem>>, %arg3: memref<1x128xf32, #tpu.memory_space<vmem>>, %arg4: memref<128x128xf32, #tpu.memory_space<vmem>>, %arg5: memref<1x128xf32, #tpu.memory_space<vmem>>, %arg6: memref<8x128xf32, #tpu.memory_space<vmem>>) attributes {dimension_semantics = [#tpu.dimension_semantics<parallel>], iteration_bounds = array<i64: 1>, scalar_prefetch = 0 : i64, scratch_operands = 0 : i64, tpu.core_type = #tpu.core_type<tc>, window_params = [{transform_indices = @transform_0, window_bounds = array<i64: 8, 1>}, {pipeline_mode = #tpu.pipeline_mode<synchronous>, transform_indices = @transform_1, window_bounds = array<i64: 256, 128>}, {pipeline_mode = #tpu.pipeline_mode<synchronous>, transform_indices = @transform_2, window_bounds = array<i64: 1, 128>}, {pipeline_mode = #tpu.pipeline_mode<synchronous>, transform_indices = @transform_3, window_bounds = array<i64: 128, 128>}, {pipeline_mode = #tpu.pipeline_mode<synchronous>, transform_indices = @transform_4, window_bounds = array<i64: 1, 128>}, {transform_indices = @transform_5, window_bounds = array<i64: 8, 128>}]} {
    %c0 = arith.constant 0 : index
    %c0_0 = arith.constant 0 : index
    %0 = vector.load %arg1[%c0, %c0_0] : memref<8x1xf32, #tpu.memory_space<vmem>>, vector<8x1xf32>
    %1 = tpu.iota {dimensions = array<i32: 1>} : vector<1x128xi32>
    %2 = arith.sitofp %1 : vector<1x128xi32> to vector<1x128xf32>
    %cst = arith.constant -9.21034049 : f32
    %3 = vector.broadcast %cst : f32 to vector<1x128xf32>
    %4 = arith.mulf %3, %2 : vector<1x128xf32>
    %cst_1 = arith.constant 1.280000e+02 : f32
    %5 = vector.broadcast %cst_1 : f32 to vector<1x128xf32>
    %6 = arith.divf %4, %5 : vector<1x128xf32>
    %7 = math.exp %6 : vector<1x128xf32>
    %8 = vector.broadcast %0 : vector<8x1xf32> to vector<8x128xf32>
    %9 = vector.broadcast %7 : vector<1x128xf32> to vector<8x128xf32>
    %10 = arith.mulf %8, %9 : vector<8x128xf32>
    %11 = math.cos %10 : vector<8x128xf32>
    %12 = math.sin %10 : vector<8x128xf32>
    %13 = tpu.concatenate %11, %12 in 1 : vector<8x128xf32>, vector<8x128xf32> -> vector<8x256xf32>
    %c0_2 = arith.constant 0 : index
    %c0_3 = arith.constant 0 : index
    %14 = vector.load %arg2[%c0_2, %c0_3] : memref<256x128xf32, #tpu.memory_space<vmem>>, vector<256x128xf32>
    %cst_4 = arith.constant dense<0.000000e+00> : vector<8x128xf32>
    %15 = tpu.matmul %13, %14, %cst_4 {dimension_numbers = #tpu.dot_dimension_numbers<[1], [0], [0], [1], [0, 0, 1, 1], [], []>} : vector<8x256xf32>, vector<256x128xf32>, vector<8x128xf32> -> vector<8x128xf32>
    %c0_5 = arith.constant 0 : index
    %c0_6 = arith.constant 0 : index
    %16 = vector.load %arg3[%c0_5, %c0_6] : memref<1x128xf32, #tpu.memory_space<vmem>>, vector<1x128xf32>
    %17 = vector.broadcast %16 : vector<1x128xf32> to vector<8x128xf32>
    %18 = arith.addf %15, %17 : vector<8x128xf32>
    %cst_7 = arith.constant 5.000000e-01 : f32
    %19 = vector.broadcast %cst_7 : f32 to vector<8x128xf32>
    %20 = arith.mulf %19, %18 : vector<8x128xf32>
    %21 = math.tanh %20 : vector<8x128xf32>
    %cst_8 = arith.constant 5.000000e-01 : f32
    %22 = vector.broadcast %cst_8 : f32 to vector<8x128xf32>
    %23 = arith.mulf %22, %21 : vector<8x128xf32>
    %cst_9 = arith.constant 5.000000e-01 : f32
    %24 = vector.broadcast %cst_9 : f32 to vector<8x128xf32>
    %25 = arith.addf %23, %24 : vector<8x128xf32>
    %26 = arith.mulf %18, %25 : vector<8x128xf32>
    %c0_10 = arith.constant 0 : index
    %c0_11 = arith.constant 0 : index
    %27 = vector.load %arg4[%c0_10, %c0_11] : memref<128x128xf32, #tpu.memory_space<vmem>>, vector<128x128xf32>
    %cst_12 = arith.constant dense<0.000000e+00> : vector<8x128xf32>
    %28 = tpu.matmul %26, %27, %cst_12 {dimension_numbers = #tpu.dot_dimension_numbers<[1], [0], [0], [1], [0, 0, 1, 1], [], []>} : vector<8x128xf32>, vector<128x128xf32>, vector<8x128xf32> -> vector<8x128xf32>
    %c0_13 = arith.constant 0 : index
    %c0_14 = arith.constant 0 : index
    %29 = vector.load %arg5[%c0_13, %c0_14] : memref<1x128xf32, #tpu.memory_space<vmem>>, vector<1x128xf32>
    %30 = vector.broadcast %29 : vector<1x128xf32> to vector<8x128xf32>
    %31 = arith.addf %28, %30 : vector<8x128xf32>
    %c0_15 = arith.constant 0 : index
    %c0_16 = arith.constant 0 : index
    %32 = vector.load %arg6[%c0_15, %c0_16] : memref<8x128xf32, #tpu.memory_space<vmem>>, vector<8x128xf32>
    tpu.vector_store %arg6[%c0_15, %c0_16], %31 {strides = array<i32>} : memref<8x128xf32, #tpu.memory_space<vmem>>, vector<8x128xf32>,
    return
  }
  func.func @transform_0(%arg0: i32) -> (i32, i32) {
    %c0_i32 = arith.constant 0 : i32
    %c0_i32_0 = arith.constant 0 : i32
    return %arg0, %c0_i32 : i32, i32
  }
  func.func @transform_1(%arg0: i32) -> (i32, i32) {
    %c0_i32 = arith.constant 0 : i32
    %c0_i32_0 = arith.constant 0 : i32
    %c0_i32_1 = arith.constant 0 : i32
    return %c0_i32, %c0_i32_0 : i32, i32
  }
  func.func @transform_2(%arg0: i32) -> (i32, i32) {
    %c0_i32 = arith.constant 0 : i32
    %c0_i32_0 = arith.constant 0 : i32
    %c0_i32_1 = arith.constant 0 : i32
    return %c0_i32, %c0_i32_0 : i32, i32
  }
  func.func @transform_3(%arg0: i32) -> (i32, i32) {
    %c0_i32 = arith.constant 0 : i32
    %c0_i32_0 = arith.constant 0 : i32
    %c0_i32_1 = arith.constant 0 : i32
    return %c0_i32, %c0_i32_0 : i32, i32
  }
  func.func @transform_4(%arg0: i32) -> (i32, i32) {
    %c0_i32 = arith.constant 0 : i32
    %c0_i32_0 = arith.constant 0 : i32
    %c0_i32_1 = arith.constant 0 : i32
    return %c0_i32, %c0_i32_0 : i32, i32
  }
  func.func @transform_5(%arg0: i32) -> (i32, i32) {
    %c0_i32 = arith.constant 0 : i32
    %c0_i32_0 = arith.constant 0 : i32
    return %arg0, %c0_i32 : i32, i32
  }
}

</mosaic_0001>

<llo_original>
// kernel: tpu_custom_call.1
$region0: #{tpu_custom_call.1}
  #allocation0 [shape = 'u32[]', space=smem, size = 0x4, offset = 0x4, fixed_abs, tag = 'smem constant byte address 0x4 - core index']
  #allocation1 [shape = 'u32[144,128]{1,0:T(1,128)}', space=vmem, size = 0x12000, scoped, tag = 'internal scratch']
  %s0 = inlined_call_operand.vmem [shape: f32[8,1], index: 0, kind: input, shape index: {}]
  %s1 = inlined_call_operand.hbm [shape: f32[256,128], index: 1, kind: input, shape index: {}]
  %s2 = inlined_call_operand.vmem [shape: f32[1,128], index: 2, kind: input, shape index: {}]
  %s3 = inlined_call_operand.hbm [shape: f32[128,128], index: 3, kind: input, shape index: {}]
  %s4 = inlined_call_operand.vmem [shape: f32[1,128], index: 4, kind: input, shape index: {}]
  %s5 = inlined_call_operand.hbm [shape: f32[8,128], index: 5, kind: output, shape index: {}]
  %s6 = sld [smem:[#allocation0]]
  $region38: #{tpu_custom_call.1} parent=0
    _
  %s8 = ssub.s32 1, %s6
  %s9 = scalar_select 0, %s8, %s6
  $region1: #{tpu_custom_call.1} parent=0
    #allocation2 [shape = 'u8[131072]{0}', space=vmem, size = 0x20000, scoped, tag = 'input window, operand 1, single buffered']
    #allocation3 [shape = 's32[1]{0}', space=sflag, size = 0x4, scoped, tag = 'scoped memory for tpu_custom_call.1']
    #allocation4 [shape = 's32[1]{0}', space=sflag, size = 0x4, scoped, tag = 'scoped memory for tpu_custom_call.1']
    #allocation5 [shape = 'u8[65536]{0}', space=vmem, size = 0x10000, scoped, tag = 'input window, operand 3, single buffered']
    #allocation6 [shape = 's32[1]{0}', space=sflag, size = 0x4, scoped, tag = 'scoped memory for tpu_custom_call.1']
    #allocation7 [shape = 'u8[4096]{0}', space=vmem, size = 0x1000, scoped, tag = 'output window, operand 0, single buffered']
    %10 = vsyncpa [#allocation3], 0
    %11 = vsyncpa [#allocation6], 0
    %12 = vsyncpa [#allocation4], 0
    // Predicated region
    $region2: #{tpu_custom_call.1} parent=1 // pred_check
      _
    $region3: #{tpu_custom_call.1} parent=1 // pred_check_branch
      %14 = sbr.rel (0) target = $region5
    $region4: #{tpu_custom_call.1} parent=1 // pred_region
      _
    $region5: #{tpu_custom_call.1} parent=1 // pred_fallthru
      _
    // Predicated region
    $region6: #{tpu_custom_call.1} parent=1 // pred_check
      _
    $region7: #{tpu_custom_call.1} parent=1 // pred_check_branch
      %16 = sbr.rel (0) target = $region9
    $region8: #{tpu_custom_call.1} parent=1 // pred_region
      %s18 = ssub.s32 4096, 4096
      %19 = vsyncadd [#allocation3], %s18
      %s20 = sshll.u32 [#allocation2], 4
      %s21 = int_to_ptr.vmem [resolvable:$true] %s20
      %26 = dma.hbm_to_vmem [thread:$0]  %s1, 4096, %s21, [#allocation3], 128, 128, 8
    $region9: #{tpu_custom_call.1} parent=1 // pred_fallthru
      _
    // Predicated region
    $region10: #{tpu_custom_call.1} parent=1 // pred_check
      _
    $region11: #{tpu_custom_call.1} parent=1 // pred_check_branch
      %28 = sbr.rel (0) target = $region13
    $region12: #{tpu_custom_call.1} parent=1 // pred_region
      _
    $region13: #{tpu_custom_call.1} parent=1 // pred_fallthru
      _
    // Predicated region
    $region14: #{tpu_custom_call.1} parent=1 // pred_check
      _
    $region15: #{tpu_custom_call.1} parent=1 // pred_check_branch
      %30 = sbr.rel (0) target = $region17
    $region16: #{tpu_custom_call.1} parent=1 // pred_region
      %s32 = ssub.s32 2048, 2048
      %33 = vsyncadd [#allocation6], %s32
      %s34 = sshll.u32 [#allocation5], 4
      %s35 = int_to_ptr.vmem [resolvable:$true] %s34
      %40 = dma.hbm_to_vmem [thread:$0]  %s3, 2048, %s35, [#allocation6], 128, 128, 8
    $region17: #{tpu_custom_call.1} parent=1 // pred_fallthru
      _
    // Predicated region
    $region18: #{tpu_custom_call.1} parent=1 // pred_check
      _
    $region19: #{tpu_custom_call.1} parent=1 // pred_check_branch
      %42 = sbr.rel (0) target = $region21
    $region20: #{tpu_custom_call.1} parent=1 // pred_region
      _
    $region21: #{tpu_custom_call.1} parent=1 // pred_fallthru
      _
    // Predicated region
    $region22: #{tpu_custom_call.1} parent=1 // pred_check
      _
    $region23: #{tpu_custom_call.1} parent=1 // pred_check_branch
      %44 = sbr.rel (0) target = $region25
    $region24: #{tpu_custom_call.1} parent=1 // pred_region
      %45 = dma.done [#allocation3], 4096
    $region25: #{tpu_custom_call.1} parent=1 // pred_fallthru
      _
    // Predicated region
    $region26: #{tpu_custom_call.1} parent=1 // pred_check
      _
    $region27: #{tpu_custom_call.1} parent=1 // pred_check_branch
      %47 = sbr.rel (0) target = $region29
    $region28: #{tpu_custom_call.1} parent=1 // pred_region
      %48 = dma.done [#allocation6], 2048
    $region29: #{tpu_custom_call.1} parent=1 // pred_fallthru
      _
    %v49 = vld [vmem:[%s0] sm:$0xff]
    %v50 = vlaneseq
    %v51 = vand.u32 %v50, 127
    %v52 = vcvt.s32.f32 %v51
    %v53 = vmul.f32 %v52, -9.2103405
    %v54 = vrcp.pop 128.0
    %v55 = vmul.f32 %v53, %v54
    %v56 = vmul.f32 %v55, 1.442695
    %v57 = vpow.pop %v56
    %59 = vset.pattern.permute.xlu0 0
    %60 = vperm.xlu0 %59, %v49
    %v61 = vpop.permute.xlu0 %60
    %v63 = vmul.f32 %v61, %v57
    %v64 = vand.u32 2147483647, %v63
    %vm65 = vcmp.le.f32.partialorder %v64, 0.7853982
    %vm66 = vcmp.lt.s32.totalorder %v63, 0
    %v67 = vand.u32 %v63, 2139095040
    %v68 = vshrl.u32 %v67, 23
    %v69 = vsub.s32 %v68, 127
    %v70 = vand.u32 2147483647, %v63
    %v71 = vand.u32 %v70, 8388607
    %v72 = vor.u32 %v71, 8388608
    %v73 = vsub.s32 0, %v72
    %v74 = vadd.s32 %v69, 1
    %vm75 = vcmp.gt.s32.totalorder %v74, 0
    %v76 = vsel %vm75, %v74, 0
    %v77 = vshrl.u32 %v76, 5
    %v78 = vand.u32 %v76, 31
    %v79 = vsub.s32 32, %v78
    %v80 = vshrl.u32 683565275, %v79
    %v81 = vshll.u32 683565275, %v78
    %v82 = vshrl.u32 2475754826, %v79
    %v83 = vor.u32 %v81, %v82
    %v84 = vshll.u32 2475754826, %v78
    %v85 = vshrl.u32 2131351028, %v79
    %v86 = vor.u32 %v84, %v85
    %v87 = vshll.u32 2131351028, %v78
    %v88 = vshrl.u32 2102212464, %v79
    %v89 = vor.u32 %v87, %v88
    %v90 = vshll.u32 2102212464, %v78
    %v91 = vshrl.u32 920167782, %v79
    %v92 = vor.u32 %v90, %v91
    %v93 = vshll.u32 920167782, %v78
    %v94 = vshrl.u32 1326507024, %v79
    %v95 = vor.u32 %v93, %v94
    %vm96 = vcmp.lt.s32.totalorder %v77, 1
    %vm97 = vcmp.lt.s32.totalorder %v77, 2
    %vm98 = vcmp.lt.s32.totalorder %v77, 3
    %vm99 = vcmp.lt.s32.totalorder %v77, 4
    %v100 = vsel %vm96, %v80, %v83
    %v101 = vsel %vm99, %v89, 2102212464
    %v102 = vsel %vm98, %v86, %v101
    %v103 = vsel %vm97, %v100, %v102
    %v104 = vsel %vm96, %v83, %v86
    %v105 = vsel %vm99, %v92, 920167782
    %v106 = vsel %vm98, %v89, %v105
    %v107 = vsel %vm97, %v104, %v106
    %v108 = vsel %vm96, %v86, %v89
    %v109 = vsel %vm99, %v95, 1326507024
    %v110 = vsel %vm98, %v92, %v109
    %v111 = vsel %vm97, %v108, %v110
    %v112 = vshll.u32 %v72, 8
    %v113 = vmul.u32.u64.compose %v112, %v111
    %v114 = vextract.low.u32 %v113
    %v115 = vextract.high.u32 %v113
    %v116 = vmul.u32.u64.compose %v112, %v107
    %v117 = vextract.low.u32 %v116
    %v118 = vextract.high.u32 %v116
    %v119 = vmul.u32 %v112, %v103
    %v120 = vadd.s32 %v115, %v117
    %vm121 = vc.u32 %v115, %v117
    %v122 = vadd.s32 %v118, 1
    %v123 = vsel %vm121, %v122, %v118
    %v124 = vadd.s32 %v119, %v123
    %v125 = vadd.s32 %v124, 536870912
    %v126 = vshrl.u32 %v125, 30
    %v127 = vshll.u32 %v126, 30
    %v128 = vsub.s32 %v124, %v127
    %vm129 = vcmp.lt.s32.totalorder %v128, 0
    %v130 = vsub.s32 0, %v128
    %v131 = vsel %vm129, %v130, %v128
    %v132 = vclz %v131
    %v133 = vsub.s32 %v132, 2
    %vm134 = vcmp.gt.s32.totalorder 0, %v133
    %v135 = vsel %vm134, 0, %v133
    %v136 = vsub.s32 32, %v135
    %v137 = vshll.u32 %v128, %v135
    %v138 = vshrl.u32 %v120, %v136
    %v139 = vor.u32 %v137, %v138
    %v140 = vsub.s32 4294967266, %v135
    %v141 = vadd.s32 %v140, 127
    %v142 = vshll.u32 %v141, 23
    %v143 = vor.u32 4788187, %v142
    %v144 = vand.u32 2147483647, %v143
    %v146 = vcvt.s32.f32 %v139
    %v147 = vmul.f32 %v146, %v144
    %v148 = vxor.u32 %v147, 2147483648
    %v149 = vsel %vm66, %v148, %v147
    %v150 = vsub.s32 4, %v126
    %v151 = vsel %vm66, %v150, %v126
    %v152 = vsel %vm65, %v63, %v149
    %v153 = vsel %vm65, 0, %v151
    %v154 = vcosq.f32.pop %v152
    %v155 = vsinq.f32.pop %v152
    %vm156 = vweird.f32 %v63
    %v157 = vand.u32 %v153, 3
    %vm158 = vcmp.lt.s32.totalorder %v157, 2
    %vm159 = vcmp.eq.s32.totalorder %v157, 0
    %v160 = vxor.u32 %v155, 2147483648
    %v161 = vsel %vm159, %v154, %v160
    %vm162 = vcmp.eq.s32.totalorder %v157, 2
    %v163 = vxor.u32 %v154, 2147483648
    %v164 = vsel %vm162, %v163, %v155
    %v165 = vsel %vm158, %v161, %v164
    %v166 = vsel %vm156, nan, %v165
    %v167 = vand.u32 2147483647, %v63
    %vm168 = vcmp.le.f32.partialorder %v167, 0.7853982
    %vm169 = vcmp.lt.s32.totalorder %v63, 0
    %v170 = vand.u32 %v63, 2139095040
    %v171 = vshrl.u32 %v170, 23
    %v172 = vsub.s32 %v171, 127
    %v173 = vand.u32 2147483647, %v63
    %v174 = vand.u32 %v173, 8388607
    %v175 = vor.u32 %v174, 8388608
    %v176 = vsub.s32 0, %v175
    %v177 = vadd.s32 %v172, 1
    %vm178 = vcmp.gt.s32.totalorder %v177, 0
    %v179 = vsel %vm178, %v177, 0
    %v180 = vshrl.u32 %v179, 5
    %v181 = vand.u32 %v179, 31
    %v182 = vsub.s32 32, %v181
    %v183 = vshrl.u32 683565275, %v182
    %v184 = vshll.u32 683565275, %v181
    %v185 = vshrl.u32 2475754826, %v182
    %v186 = vor.u32 %v184, %v185
    %v187 = vshll.u32 2475754826, %v181
    %v188 = vshrl.u32 2131351028, %v182
    %v189 = vor.u32 %v187, %v188
    %v190 = vshll.u32 2131351028, %v181
    %v191 = vshrl.u32 2102212464, %v182
    %v192 = vor.u32 %v190, %v191
    %v193 = vshll.u32 2102212464, %v181
    %v194 = vshrl.u32 920167782, %v182
    %v195 = vor.u32 %v193, %v194
    %v196 = vshll.u32 920167782, %v181
    %v197 = vshrl.u32 1326507024, %v182
    %v198 = vor.u32 %v196, %v197
    %vm199 = vcmp.lt.s32.totalorder %v180, 1
    %vm200 = vcmp.lt.s32.totalorder %v180, 2
    %vm201 = vcmp.lt.s32.totalorder %v180, 3
    %vm202 = vcmp.lt.s32.totalorder %v180, 4
    %v203 = vsel %vm199, %v183, %v186
    %v204 = vsel %vm202, %v192, 2102212464
    %v205 = vsel %vm201, %v189, %v204
    %v206 = vsel %vm200, %v203, %v205
    %v207 = vsel %vm199, %v186, %v189
    %v208 = vsel %vm202, %v195, 920167782
    %v209 = vsel %vm201, %v192, %v208
    %v210 = vsel %vm200, %v207, %v209
    %v211 = vsel %vm199, %v189, %v192
    %v212 = vsel %vm202, %v198, 1326507024
    %v213 = vsel %vm201, %v195, %v212
    %v214 = vsel %vm200, %v211, %v213
    %v215 = vshll.u32 %v175, 8
    %v216 = vmul.u32.u64.compose %v215, %v214
    %v217 = vextract.low.u32 %v216
    %v218 = vextract.high.u32 %v216
    %v219 = vmul.u32.u64.compose %v215, %v210
    %v220 = vextract.low.u32 %v219
    %v221 = vextract.high.u32 %v219
    %v222 = vmul.u32 %v215, %v206
    %v223 = vadd.s32 %v218, %v220
    %vm224 = vc.u32 %v218, %v220
    %v225 = vadd.s32 %v221, 1
    %v226 = vsel %vm224, %v225, %v221
    %v227 = vadd.s32 %v222, %v226
    %v228 = vadd.s32 %v227, 536870912
    %v229 = vshrl.u32 %v228, 30
    %v230 = vshll.u32 %v229, 30
    %v231 = vsub.s32 %v227, %v230
    %vm232 = vcmp.lt.s32.totalorder %v231, 0
    %v233 = vsub.s32 0, %v231
    %v234 = vsel %vm232, %v233, %v231
    %v235 = vclz %v234
    %v236 = vsub.s32 %v235, 2
    %vm237 = vcmp.gt.s32.totalorder 0, %v236
    %v238 = vsel %vm237, 0, %v236
    %v239 = vsub.s32 32, %v238
    %v240 = vshll.u32 %v231, %v238
    %v241 = vshrl.u32 %v223, %v239
    %v242 = vor.u32 %v240, %v241
    %v243 = vsub.s32 4294967266, %v238
    %v244 = vadd.s32 %v243, 127
    %v245 = vshll.u32 %v244, 23
    %v246 = vor.u32 4788187, %v245
    %v247 = vand.u32 2147483647, %v246
    %v249 = vcvt.s32.f32 %v242
    %v250 = vmul.f32 %v249, %v247
    %v251 = vxor.u32 %v250, 2147483648
    %v252 = vsel %vm169, %v251, %v250
    %v253 = vsub.s32 4, %v229
    %v254 = vsel %vm169, %v253, %v229
    %v255 = vsel %vm168, %v63, %v252
    %v256 = vsel %vm168, 0, %v254
    %v257 = vcosq.f32.pop %v255
    %v258 = vsinq.f32.pop %v255
    %vm259 = vweird.f32 %v63
    %v260 = vadd.s32 %v256, 3
    %v261 = vand.u32 %v260, 3
    %vm262 = vcmp.lt.s32.totalorder %v261, 2
    %vm263 = vcmp.eq.s32.totalorder %v261, 0
    %v264 = vxor.u32 %v258, 2147483648
    %v265 = vsel %vm263, %v257, %v264
    %vm266 = vcmp.eq.s32.totalorder %v261, 2
    %v267 = vxor.u32 %v257, 2147483648
    %v268 = vsel %vm266, %v267, %v258
    %v269 = vsel %vm262, %v265, %v268
    %v270 = vsel %vm259, nan, %v269
    %v271 = vld [vmem:[#allocation2] sm:$0xff]
    %v272 = vld [vmem:[#allocation2 + $0x8] sm:$0xff]
    %v273 = vld [vmem:[#allocation2 + $0x10] sm:$0xff]
    %v274 = vld [vmem:[#allocation2 + $0x18] sm:$0xff]
    %v275 = vld [vmem:[#allocation2 + $0x20] sm:$0xff]
    %v276 = vld [vmem:[#allocation2 + $0x28] sm:$0xff]
    %v277 = vld [vmem:[#allocation2 + $0x30] sm:$0xff]
    %v278 = vld [vmem:[#allocation2 + $0x38] sm:$0xff]
    %v279 = vld [vmem:[#allocation2 + $0x40] sm:$0xff]
    %v280 = vld [vmem:[#allocation2 + $0x48] sm:$0xff]
    %v281 = vld [vmem:[#allocation2 + $0x50] sm:$0xff]
    %v282 = vld [vmem:[#allocation2 + $0x58] sm:$0xff]
    %v283 = vld [vmem:[#allocation2 + $0x60] sm:$0xff]
    %v284 = vld [vmem:[#allocation2 + $0x68] sm:$0xff]
    %v285 = vld [vmem:[#allocation2 + $0x70] sm:$0xff]
    %v286 = vld [vmem:[#allocation2 + $0x78] sm:$0xff]
    %v287 = vld [vmem:[#allocation2 + $0x80] sm:$0xff]
    %v288 = vld [vmem:[#allocation2 + $0x88] sm:$0xff]
    %v289 = vld [vmem:[#allocation2 + $0x90] sm:$0xff]
    %v290 = vld [vmem:[#allocation2 + $0x98] sm:$0xff]
    %v291 = vld [vmem:[#allocation2 + $0xa0] sm:$0xff]
    %v292 = vld [vmem:[#allocation2 + $0xa8] sm:$0xff]
    %v293 = vld [vmem:[#allocation2 + $0xb0] sm:$0xff]
    %v294 = vld [vmem:[#allocation2 + $0xb8] sm:$0xff]
    %v295 = vld [vmem:[#allocation2 + $0xc0] sm:$0xff]
    %v296 = vld [vmem:[#allocation2 + $0xc8] sm:$0xff]
    %v297 = vld [vmem:[#allocation2 + $0xd0] sm:$0xff]
    %v298 = vld [vmem:[#allocation2 + $0xd8] sm:$0xff]
    %v299 = vld [vmem:[#allocation2 + $0xe0] sm:$0xff]
    %v300 = vld [vmem:[#allocation2 + $0xe8] sm:$0xff]
    %v301 = vld [vmem:[#allocation2 + $0xf0] sm:$0xff]
    %v302 = vld [vmem:[#allocation2 + $0xf8] sm:$0xff]
    %v303 = vld [vmem:[%s2] sm:$0x1]
    %v305 = vlaneseq
    %v306 = vshrl.u32 %v305, 7
    %v307 = vsub.s32 0, %v306
    %v308 = vrot.slane %v303, %v307
    %310 = vmatprep.subr.mxu0 0.0
    %311 = vmatpush1.msra.mxu0 %v286
    %312 = vmatprep.subr.mxu0 0.0
    %313 = vmatpush1.msra.mxu0 %v285
    %314 = vmatprep.subr.mxu0 0.0
    %315 = vmatpush1.msra.mxu0 %v284
    %316 = vmatprep.subr.mxu0 0.0
    %317 = vmatpush1.msra.mxu0 %v283
    %318 = vmatprep.subr.mxu0 0.0
    %319 = vmatpush1.msra.mxu0 %v282
    %320 = vmatprep.subr.mxu0 0.0
    %321 = vmatpush1.msra.mxu0 %v281
    %322 = vmatprep.subr.mxu0 0.0
    %323 = vmatpush1.msra.mxu0 %v280
    %324 = vmatprep.subr.mxu0 0.0
    %325 = vmatpush1.msra.mxu0 %v279
    %326 = vmatprep.subr.mxu0 0.0
    %327 = vmatpush1.msra.mxu0 %v278
    %328 = vmatprep.subr.mxu0 0.0
    %329 = vmatpush1.msra.mxu0 %v277
    %330 = vmatprep.subr.mxu0 0.0
    %331 = vmatpush1.msra.mxu0 %v276
    %332 = vmatprep.subr.mxu0 0.0
    %333 = vmatpush1.msra.mxu0 %v275
    %334 = vmatprep.subr.mxu0 0.0
    %335 = vmatpush1.msra.mxu0 %v274
    %336 = vmatprep.subr.mxu0 0.0
    %337 = vmatpush1.msra.mxu0 %v273
    %338 = vmatprep.subr.mxu0 0.0
    %339 = vmatpush1.msra.mxu0 %v272
    %340 = vmatprep.subr.mxu0 0.0
    %341 = vmatpush1.msra.mxu0 %v271
    %342 = vmatprep.subr.mxu0 0.0
    %343 = vmatpush2.msra.mxu0 %v302
    %344 = vmatprep.subr.mxu0 0.0
    %345 = vmatpush2.msra.mxu0 %v301
    %346 = vmatprep.subr.mxu0 0.0
    %347 = vmatpush2.msra.mxu0 %v300
    %348 = vmatprep.subr.mxu0 0.0
    %349 = vmatpush2.msra.mxu0 %v299
    %350 = vmatprep.subr.mxu0 0.0
    %351 = vmatpush2.msra.mxu0 %v298
    %352 = vmatprep.subr.mxu0 0.0
    %353 = vmatpush2.msra.mxu0 %v297
    %354 = vmatprep.subr.mxu0 0.0
    %355 = vmatpush2.msra.mxu0 %v296
    %356 = vmatprep.subr.mxu0 0.0
    %357 = vmatpush2.msra.mxu0 %v295
    %358 = vmatprep.subr.mxu0 0.0
    %359 = vmatpush2.msra.mxu0 %v294
    %360 = vmatprep.subr.mxu0 0.0
    %361 = vmatpush2.msra.mxu0 %v293
    %362 = vmatprep.subr.mxu0 0.0
    %363 = vmatpush2.msra.mxu0 %v292
    %364 = vmatprep.subr.mxu0 0.0
    %365 = vmatpush2.msra.mxu0 %v291
    %366 = vmatprep.subr.mxu0 0.0
    %367 = vmatpush2.msra.mxu0 %v290
    %368 = vmatprep.subr.mxu0 0.0
    %369 = vmatpush2.msra.mxu0 %v289
    %370 = vmatprep.subr.mxu0 0.0
    %371 = vmatpush2.msra.mxu0 %v288
    %372 = vmatprep.subr.mxu0 0.0
    %373 = vmatpush2.msra.mxu0 %v287
    %374 = vmatprep.mubr.f32.mxu0 %v270
    %375 = vmatmul.mubr.f32.gmra.mxu0 %v166
    %v376 = vpop.f32.mrf.mxu0
    %v377 = vadd.f32 %v308, %v376
    %v378 = vpop.f32.mrf.mxu0
    %379 = vdwg.mxu0
    %v380 = vmul.f32 %v377, 0.5
    %v381 = vtanh.pop %v380
    %v382 = vmul.f32 %v381, 0.5
    %v383 = vadd.f32 %v382, 0.5
    %v384 = vmul.f32 %v377, %v383
    %v385 = vld [vmem:[#allocation5] sm:$0xff]
    %v386 = vld [vmem:[#allocation5 + $0x8] sm:$0xff]
    %v387 = vld [vmem:[#allocation5 + $0x10] sm:$0xff]
    %v388 = vld [vmem:[#allocation5 + $0x18] sm:$0xff]
    %v389 = vld [vmem:[#allocation5 + $0x20] sm:$0xff]
    %v390 = vld [vmem:[#allocation5 + $0x28] sm:$0xff]
    %v391 = vld [vmem:[#allocation5 + $0x30] sm:$0xff]
    %v392 = vld [vmem:[#allocation5 + $0x38] sm:$0xff]
    %v393 = vld [vmem:[#allocation5 + $0x40] sm:$0xff]
    %v394 = vld [vmem:[#allocation5 + $0x48] sm:$0xff]
    %v395 = vld [vmem:[#allocation5 + $0x50] sm:$0xff]
    %v396 = vld [vmem:[#allocation5 + $0x58] sm:$0xff]
    %v397 = vld [vmem:[#allocation5 + $0x60] sm:$0xff]
    %v398 = vld [vmem:[#allocation5 + $0x68] sm:$0xff]
    %v399 = vld [vmem:[#allocation5 + $0x70] sm:$0xff]
    %v400 = vld [vmem:[#allocation5 + $0x78] sm:$0xff]
    %v401 = vld [vmem:[%s4] sm:$0x1]
    %v403 = vlaneseq
    %v404 = vshrl.u32 %v403, 7
    %v405 = vsub.s32 0, %v404
    %v406 = vrot.slane %v401, %v405
    %408 = vmatprep.subr.mxu0 0.0
    %409 = vmatpush1.msra.mxu0 %v400
    %410 = vmatprep.subr.mxu0 0.0
    %411 = vmatpush1.msra.mxu0 %v399
    %412 = vmatprep.subr.mxu0 0.0
    %413 = vmatpush1.msra.mxu0 %v398
    %414 = vmatprep.subr.mxu0 0.0
    %415 = vmatpush1.msra.mxu0 %v397
    %416 = vmatprep.subr.mxu0 0.0
    %417 = vmatpush1.msra.mxu0 %v396
    %418 = vmatprep.subr.mxu0 0.0
    %419 = vmatpush1.msra.mxu0 %v395
    %420 = vmatprep.subr.mxu0 0.0
    %421 = vmatpush1.msra.mxu0 %v394
    %422 = vmatprep.subr.mxu0 0.0
    %423 = vmatpush1.msra.mxu0 %v393
    %424 = vmatprep.subr.mxu0 0.0
    %425 = vmatpush1.msra.mxu0 %v392
    %426 = vmatprep.subr.mxu0 0.0
    %427 = vmatpush1.msra.mxu0 %v391
    %428 = vmatprep.subr.mxu0 0.0
    %429 = vmatpush1.msra.mxu0 %v390
    %430 = vmatprep.subr.mxu0 0.0
    %431 = vmatpush1.msra.mxu0 %v389
    %432 = vmatprep.subr.mxu0 0.0
    %433 = vmatpush1.msra.mxu0 %v388
    %434 = vmatprep.subr.mxu0 0.0
    %435 = vmatpush1.msra.mxu0 %v387
    %436 = vmatprep.subr.mxu0 0.0
    %437 = vmatpush1.msra.mxu0 %v386
    %438 = vmatprep.subr.mxu0 0.0
    %439 = vmatpush1.msra.mxu0 %v385
    %440 = vmatprep.subr.mxu0 0.0
    %441 = vmatpush2.msra.mxu0 0.0
    %442 = vmatprep.subr.mxu0 0.0
    %443 = vmatpush2.msra.mxu0 0.0
    %444 = vmatprep.subr.mxu0 0.0
    %445 = vmatpush2.msra.mxu0 0.0
    %446 = vmatprep.subr.mxu0 0.0
    %447 = vmatpush2.msra.mxu0 0.0
    %448 = vmatprep.subr.mxu0 0.0
    %449 = vmatpush2.msra.mxu0 0.0
    %450 = vmatprep.subr.mxu0 0.0
    %451 = vmatpush2.msra.mxu0 0.0
    %452 = vmatprep.subr.mxu0 0.0
    %453 = vmatpush2.msra.mxu0 0.0
    %454 = vmatprep.subr.mxu0 0.0
    %455 = vmatpush2.msra.mxu0 0.0
    %456 = vmatprep.subr.mxu0 0.0
    %457 = vmatpush2.msra.mxu0 0.0
    %458 = vmatprep.subr.mxu0 0.0
    %459 = vmatpush2.msra.mxu0 0.0
    %460 = vmatprep.subr.mxu0 0.0
    %461 = vmatpush2.msra.mxu0 0.0
    %462 = vmatprep.subr.mxu0 0.0
    %463 = vmatpush2.msra.mxu0 0.0
    %464 = vmatprep.subr.mxu0 0.0
    %465 = vmatpush2.msra.mxu0 0.0
    %466 = vmatprep.subr.mxu0 0.0
    %467 = vmatpush2.msra.mxu0 0.0
    %468 = vmatprep.subr.mxu0 0.0
    %469 = vmatpush2.msra.mxu0 0.0
    %470 = vmatprep.subr.mxu0 0.0
    %471 = vmatpush2.msra.mxu0 0.0
    %472 = vmatprep.mubr.f32.mxu0 0.0
    %473 = vmatmul.mubr.f32.gmra.mxu0 %v384
    %v474 = vpop.f32.mrf.mxu0
    %v475 = vadd.f32 %v406, %v474
    %v476 = vpop.f32.mrf.mxu0
    %477 = vdwg.mxu0
    %478 = vst [vmem:[#allocation7] sm:$0xff] %v475
    // Predicated region
    $region30: #{tpu_custom_call.1} parent=1 // pred_check
      _
    $region31: #{tpu_custom_call.1} parent=1 // pred_check_branch
      %480 = sbr.rel (0) target = $region33
    $region32: #{tpu_custom_call.1} parent=1 // pred_region
      %s482 = ssub.s32 128, 128
      %483 = vsyncadd [#allocation4], %s482
      %s485 = sshll.u32 [#allocation7], 4
      %s486 = int_to_ptr.vmem [resolvable:$true] %s485
      %488 = dma.vmem_to_hbm [thread:$0]  %s486, 128, %s5, [#allocation4]
    $region33: #{tpu_custom_call.1} parent=1 // pred_fallthru
      _
    // Predicated region
    $region34: #{tpu_custom_call.1} parent=1 // pred_check
      _
    $region35: #{tpu_custom_call.1} parent=1 // pred_check_branch
      %490 = sbr.rel (0) target = $region37
    $region36: #{tpu_custom_call.1} parent=1 // pred_region
      %491 = dma.done [#allocation4], 128
    $region37: #{tpu_custom_call.1} parent=1 // pred_fallthru
      _
    %492 = vsyncpa [#allocation3], 1
    %493 = vsyncpa [#allocation6], 1
    %494 = vsyncpa [#allocation4], 1

</llo_original>
